<compile_context>
chip_gen: v5e
topology: v5e:2x2
jax: 0.10.0
libtpu: 0.0.40
codegen_flags: <defaults>
</compile_context>

<pallas_src>
import functools

import jax
import jax.numpy as jnp
import numpy as np
from jax.experimental import pallas as pl
from jax.experimental.pallas import tpu as pltpu


# ---------------------------------------------------------------------------
# Pallas kernel
# ---------------------------------------------------------------------------
def _sc_layer_kernel(s_ref, x_ref, wf_ref, b_ref, out_ref, *, K: int, Cout: int):
    """One-block kernel: fused projection + Horner propagation.

    s_ref  : (N, N)          dense propagation matrix S (f32)
    x_ref  : (N, Cin)        node features
    wf_ref : (Cin, Wpad)     [W_0 | W_1 | ... | W_K | W_har | 0-pad], Wpad % 128 == 0
    b_ref  : (1, Cout)       SMConv bias
    out_ref: (N, 2*Cout)     [z_low | z_har]
    """
    x = x_ref[...]
    s = s_ref[...]

    # One wide, lane-dense projection matmul on the MXU.
    p = jnp.dot(x, wf_ref[...], preferred_element_type=jnp.float32)

    # Horner evaluation of  sum_k S^k (x @ W_k):
    #   acc = p_K ; acc = p_k + S @ acc  for k = K-1 .. 0
    acc = p[:, K * Cout:(K + 1) * Cout]
    for k in range(K - 1, -1, -1):
        acc = p[:, k * Cout:(k + 1) * Cout] + jnp.dot(
            s, acc, preferred_element_type=jnp.float32)

    z_low = acc + b_ref[...]
    z_har = p[:, (K + 1) * Cout:(K + 2) * Cout]

    out_ref[:, :Cout] = z_low.astype(out_ref.dtype)
    out_ref[:, Cout:] = z_har.astype(out_ref.dtype)


def harm_lower_sc_layer(x, S, w_stack, w_har, bias, *, K: int):
    """Run the Pallas kernel. Returns (z_low, z_har)."""
    N, Cin = x.shape
    Cout = w_har.shape[1]

    # Fuse all projection weights into one lane-dense RHS; pad the fused
    # output width to a multiple of 128 lanes (zero columns, sliced off by
    # simply never reading them in the kernel).
    w_fused = jnp.concatenate(
        [w_stack[k] for k in range(K + 1)] + [w_har], axis=1)
    wtot = (K + 2) * Cout
    wpad = ((wtot + 127) // 128) * 128
    if wpad != wtot:
        w_fused = jnp.pad(w_fused, ((0, 0), (0, wpad - wtot)))
    w_fused = w_fused.astype(jnp.float32)

    bias2d = bias.reshape(1, Cout).astype(jnp.float32)
    S = S.astype(jnp.float32)
    x = x.astype(jnp.float32)

    kernel = functools.partial(_sc_layer_kernel, K=K, Cout=Cout)

    flops = int(2 * N * Cin * wpad + 2 * K * N * N * Cout)
    bytes_accessed = int(4 * (N * N + N * Cin + Cin * wpad + Cout + N * 2 * Cout))

    out = pl.pallas_call(
        kernel,
        out_shape=jax.ShapeDtypeStruct((N, 2 * Cout), jnp.float32),
        compiler_params=pltpu.CompilerParams(
            vmem_limit_bytes=64 * 1024 * 1024),
        cost_estimate=pl.CostEstimate(
            flops=flops, transcendentals=0, bytes_accessed=bytes_accessed),
    )(S, x, w_fused, bias2d)

    return out[:, :Cout], out[:, Cout:]


# ---------------------------------------------------------------------------
# Plain-JAX glue: dense propagation matrix + optional GCN normalization
# ---------------------------------------------------------------------------
def build_propagation_matrix(edge_index, edge_weight, num_nodes, normalize):
    src = edge_index[0]
    dst = edge_index[1]
    if edge_weight is None:
        edge_weight = jnp.ones((edge_index.shape[1],), dtype=jnp.float32)

    # PyG source_to_target, aggr='add':  x_new[dst] += w * x[src]  =>  S[dst, src] = w
    S = jnp.zeros((num_nodes, num_nodes), dtype=jnp.float32)
    S = S.at[dst, src].add(edge_weight)

    if normalize:
        # gcn_norm without self loops: deg over dst, D^-1/2 S D^-1/2
        deg = jnp.sum(S, axis=1)
        deg_inv_sqrt = jnp.where(deg > 0, 1.0 / jnp.sqrt(deg), 0.0)
        S = deg_inv_sqrt[:, None] * S * deg_inv_sqrt[None, :]
    return S


# ---------------------------------------------------------------------------
# Pure-JAX reference (original association order, matching the PyTorch module)
# ---------------------------------------------------------------------------
def reference_forward(x, S, w_stack, w_har, bias, K):
    out = x @ w_stack[0]
    h = x
    for k in range(1, K + 1):
        h = S @ h
        out = out + h @ w_stack[k]
    z_low = out + bias[None, :]
    z_har = x @ w_har
    return z_low, z_har


# ---------------------------------------------------------------------------
# Module wrapper (forward of Harm_Lower_SCLayer)
# ---------------------------------------------------------------------------
def harm_lower_sclayer_forward(params, x, lower_index, upper_index,
                               lower_values=None, upper_values=None,
                               sum_components=False, normalize=True, K=3):
    N = x.shape[0]
    S = build_propagation_matrix(lower_index, lower_values, N, normalize)
    z_low, z_har = harm_lower_sc_layer(
        x, S, params["w_stack"], params["w_har"], params["bias"], K=K)
    if sum_components:
        return z_low + z_har
    return {"z_low": z_low, "z_up": 0, "z_har": z_har}


if __name__ == "__main__":
    # Small, deterministic setup
    N, Cin, Cout, K, E = 16, 8, 32, 3, 48
    normalize = True

    key = jax.random.PRNGKey(0)
    k_x, k_ei, k_ew, k_w, k_wh, k_b = jax.random.split(key, 6)

    x = jax.random.normal(k_x, (N, Cin), dtype=jnp.float32)
    lower_index = jax.random.randint(k_ei, (2, E), 0, N, dtype=jnp.int32)
    lower_values = jax.random.uniform(k_ew, (E,), dtype=jnp.float32) + 0.5
    upper_index = None  # unused by Harm_Lower_SCLayer.forward

    # Deterministic parameter init (shapes from the module __init__).
    # lins[k].weight: (Cout, Cin)  -> stored transposed (Cin, Cout)
    w_stack = 0.1 * jax.random.normal(k_w, (K + 1, Cin, Cout), dtype=jnp.float32)
    # harmonic.weight: (Cout, Cin) -> transposed (Cin, Cout)
    w_har = 0.1 * jax.random.normal(k_wh, (Cin, Cout), dtype=jnp.float32)
    # SMConv bias reset_parameters -> zeros; small random to make test non-trivial
    bias = 0.01 * jax.random.normal(k_b, (Cout,), dtype=jnp.float32)

    params = {"w_stack": w_stack, "w_har": w_har, "bias": bias}

    out = harm_lower_sclayer_forward(
        params, x, lower_index, upper_index,
        lower_values=lower_values, sum_components=False,
        normalize=normalize, K=K)
    jax.block_until_ready(out["z_low"])
    jax.block_until_ready(out["z_har"])

    # Verify against pure-JAX reference in the ORIGINAL association order.
    # (Kernel uses the mathematically-equivalent S^k(xW_k) Horner form, so
    #  allow float-rounding-level differences.)
    S = build_propagation_matrix(lower_index, lower_values, N, normalize)
    ref_low, ref_har = reference_forward(x, S, w_stack, w_har, bias, K)
    np.testing.assert_allclose(np.asarray(out["z_low"]), np.asarray(ref_low),
                               rtol=1e-4, atol=1e-5)
    np.testing.assert_allclose(np.asarray(out["z_har"]), np.asarray(ref_har),
                               rtol=1e-4, atol=1e-5)
    assert out["z_up"] == 0

    print("KERNEL_OK")
</pallas_src>

<mosaic_0001>
module attributes {stable_mosaic.version = 11 : i64} {
  func.func @_sc_layer_kernel(%arg0: memref<16x16xf32, #tpu.memory_space<vmem>>, %arg1: memref<16x8xf32, #tpu.memory_space<vmem>>, %arg2: memref<8x256xf32, #tpu.memory_space<vmem>>, %arg3: memref<1x32xf32, #tpu.memory_space<vmem>>, %arg4: memref<16x64xf32, #tpu.memory_space<vmem>>) attributes {dimension_semantics = [], scalar_prefetch = 0 : i64, scratch_operands = 0 : i64, tpu.core_type = #tpu.core_type<tc>} {
    %c0 = arith.constant 0 : index
    %c0_0 = arith.constant 0 : index
    %0 = vector.load %arg1[%c0, %c0_0] : memref<16x8xf32, #tpu.memory_space<vmem>>, vector<16x8xf32>
    %c0_1 = arith.constant 0 : index
    %c0_2 = arith.constant 0 : index
    %1 = vector.load %arg0[%c0_1, %c0_2] : memref<16x16xf32, #tpu.memory_space<vmem>>, vector<16x16xf32>
    %c0_3 = arith.constant 0 : index
    %c0_4 = arith.constant 0 : index
    %2 = vector.load %arg2[%c0_3, %c0_4] : memref<8x256xf32, #tpu.memory_space<vmem>>, vector<8x256xf32>
    %cst = arith.constant dense<0.000000e+00> : vector<16x256xf32>
    %3 = tpu.matmul %0, %2, %cst {dimension_numbers = #tpu.dot_dimension_numbers<[1], [0], [0], [1], [0, 0, 1, 1], [], []>} : vector<16x8xf32>, vector<8x256xf32>, vector<16x256xf32> -> vector<16x256xf32>
    %4 = vector.extract_strided_slice %3 {offsets = [0, 96], sizes = [16, 32], strides = [1, 1]} : vector<16x256xf32> to vector<16x32xf32>
    %5 = vector.extract_strided_slice %3 {offsets = [0, 64], sizes = [16, 32], strides = [1, 1]} : vector<16x256xf32> to vector<16x32xf32>
    %cst_5 = arith.constant dense<0.000000e+00> : vector<16x32xf32>
    %6 = tpu.matmul %1, %4, %cst_5 {dimension_numbers = #tpu.dot_dimension_numbers<[1], [0], [0], [1], [0, 0, 1, 1], [], []>} : vector<16x16xf32>, vector<16x32xf32>, vector<16x32xf32> -> vector<16x32xf32>
    %7 = arith.addf %5, %6 : vector<16x32xf32>
    %8 = vector.extract_strided_slice %3 {offsets = [0, 32], sizes = [16, 32], strides = [1, 1]} : vector<16x256xf32> to vector<16x32xf32>
    %cst_6 = arith.constant dense<0.000000e+00> : vector<16x32xf32>
    %9 = tpu.matmul %1, %7, %cst_6 {dimension_numbers = #tpu.dot_dimension_numbers<[1], [0], [0], [1], [0, 0, 1, 1], [], []>} : vector<16x16xf32>, vector<16x32xf32>, vector<16x32xf32> -> vector<16x32xf32>
    %10 = arith.addf %8, %9 : vector<16x32xf32>
    %11 = vector.extract_strided_slice %3 {offsets = [0, 0], sizes = [16, 32], strides = [1, 1]} : vector<16x256xf32> to vector<16x32xf32>
    %cst_7 = arith.constant dense<0.000000e+00> : vector<16x32xf32>
    %12 = tpu.matmul %1, %10, %cst_7 {dimension_numbers = #tpu.dot_dimension_numbers<[1], [0], [0], [1], [0, 0, 1, 1], [], []>} : vector<16x16xf32>, vector<16x32xf32>, vector<16x32xf32> -> vector<16x32xf32>
    %13 = arith.addf %11, %12 : vector<16x32xf32>
    %c0_8 = arith.constant 0 : index
    %c0_9 = arith.constant 0 : index
    %14 = vector.load %arg3[%c0_8, %c0_9] : memref<1x32xf32, #tpu.memory_space<vmem>>, vector<1x32xf32>
    %15 = vector.broadcast %14 : vector<1x32xf32> to vector<16x32xf32>
    %16 = arith.addf %13, %15 : vector<16x32xf32>
    %17 = vector.extract_strided_slice %3 {offsets = [0, 128], sizes = [16, 32], strides = [1, 1]} : vector<16x256xf32> to vector<16x32xf32>
    %c0_10 = arith.constant 0 : index
    %c0_11 = arith.constant 0 : index
    %18 = vector.load %arg4[%c0_10, %c0_11] : memref<16x64xf32, #tpu.memory_space<vmem>>, vector<16x32xf32>
    tpu.vector_store %arg4[%c0_10, %c0_11], %16 {strides = array<i32>} : memref<16x64xf32, #tpu.memory_space<vmem>>, vector<16x32xf32>,
    %c0_12 = arith.constant 0 : index
    %c32 = arith.constant 32 : index
    %19 = vector.load %arg4[%c0_12, %c32] : memref<16x64xf32, #tpu.memory_space<vmem>>, vector<16x32xf32>
    tpu.vector_store %arg4[%c0_12, %c32], %17 {strides = array<i32>} : memref<16x64xf32, #tpu.memory_space<vmem>>, vector<16x32xf32>,
    return
  }
}

</mosaic_0001>

<llo_original>
// kernel: tpu_custom_call.1
$region0: #{tpu_custom_call.1}
  #allocation0 [shape = 'u32[]', space=smem, size = 0x4, offset = 0x4, fixed_abs, tag = 'smem constant byte address 0x4 - core index']
  #allocation1 [shape = 'u32[72,128]{1,0:T(1,128)}', space=vmem, size = 0x9000, scoped, tag = 'internal scratch']
  %s0 = inlined_call_operand.vmem [shape: f32[16,16], index: 0, kind: input, shape index: {}]
  %s1 = inlined_call_operand.vmem [shape: f32[16,8], index: 1, kind: input, shape index: {}]
  %s2 = inlined_call_operand.hbm [shape: f32[8,256], index: 2, kind: input, shape index: {}]
  %s3 = inlined_call_operand.vmem [shape: f32[1,32], index: 3, kind: input, shape index: {}]
  %s4 = inlined_call_operand.hbm [shape: f32[16,64], index: 4, kind: output, shape index: {}]
  %s5 = sld [smem:[#allocation0]]
  $region30: #{tpu_custom_call.1} parent=0
    _
  %s7 = ssub.s32 1, %s5
  %s8 = scalar_select 0, %s7, %s5
  $region1: #{tpu_custom_call.1} parent=0
    #allocation2 [shape = 'u8[8192]{0}', space=vmem, size = 0x2000, scoped, tag = 'input window, operand 2, single buffered']
    #allocation3 [shape = 's32[1]{0}', space=sflag, size = 0x4, scoped, tag = 'scoped memory for tpu_custom_call.1']
    #allocation4 [shape = 's32[1]{0}', space=sflag, size = 0x4, scoped, tag = 'scoped memory for tpu_custom_call.1']
    #allocation5 [shape = 'u8[8192]{0}', space=vmem, size = 0x2000, scoped, tag = 'output window, operand 0, single buffered']
    %9 = vsyncpa [#allocation3], 0
    %10 = vsyncpa [#allocation4], 0
    // Predicated region
    $region2: #{tpu_custom_call.1} parent=1 // pred_check
      _
    $region3: #{tpu_custom_call.1} parent=1 // pred_check_branch
      %12 = sbr.rel (0) target = $region5
    $region4: #{tpu_custom_call.1} parent=1 // pred_region
      _
    $region5: #{tpu_custom_call.1} parent=1 // pred_fallthru
      _
    // Predicated region
    $region6: #{tpu_custom_call.1} parent=1 // pred_check
      _
    $region7: #{tpu_custom_call.1} parent=1 // pred_check_branch
      %14 = sbr.rel (0) target = $region9
    $region8: #{tpu_custom_call.1} parent=1 // pred_region
      _
    $region9: #{tpu_custom_call.1} parent=1 // pred_fallthru
      _
    // Predicated region
    $region10: #{tpu_custom_call.1} parent=1 // pred_check
      _
    $region11: #{tpu_custom_call.1} parent=1 // pred_check_branch
      %16 = sbr.rel (0) target = $region13
    $region12: #{tpu_custom_call.1} parent=1 // pred_region
      %18 = vsyncadd [#allocation3], 0
      %s20 = sshll.u32 %s2, 4
      %s21 = int_to_ptr.hbm [resolvable:$true] %s20
      %s22 = sshll.u32 [#allocation2], 4
      %s23 = int_to_ptr.vmem [resolvable:$true] %s22
      %25 = dma.hbm_to_vmem [thread:$0]  %s21, 256, %s23, [#allocation3]
    $region13: #{tpu_custom_call.1} parent=1 // pred_fallthru
      _
    // Predicated region
    $region14: #{tpu_custom_call.1} parent=1 // pred_check
      _
    $region15: #{tpu_custom_call.1} parent=1 // pred_check_branch
      %27 = sbr.rel (0) target = $region17
    $region16: #{tpu_custom_call.1} parent=1 // pred_region
      _
    $region17: #{tpu_custom_call.1} parent=1 // pred_fallthru
      _
    // Predicated region
    $region18: #{tpu_custom_call.1} parent=1 // pred_check
      _
    $region19: #{tpu_custom_call.1} parent=1 // pred_check_branch
      %29 = sbr.rel (0) target = $region21
    $region20: #{tpu_custom_call.1} parent=1 // pred_region
      %31 = dma.done [#allocation3], 256
    $region21: #{tpu_custom_call.1} parent=1 // pred_fallthru
      _
    %v32 = vld [vmem:[%s1] sm:$0xff]
    %v33 = vld [vmem:[%s1 + $0x8] sm:$0xff]
    %v34 = vld [vmem:[%s0] sm:$0xff]
    %v35 = vld [vmem:[%s0 + $0x8] sm:$0xff]
    %v36 = vld [vmem:[#allocation2] sm:$0xff]
    %v37 = vld [vmem:[#allocation2 + $0x8] sm:$0xff]
    %vm38 = vcmask 64512
    %v40 = vsel %vm38, %v32, 0
    %v43 = vsel %vm38, %v33, 0
    %45 = vmatpush.msra.mxu0 0.0
    %46 = vmatpush.msra.mxu0 0.0
    %47 = vmatpush.msra.mxu0 0.0
    %48 = vmatpush.msra.mxu0 0.0
    %49 = vmatpush.msra.mxu0 0.0
    %50 = vmatpush.msra.mxu0 0.0
    %51 = vmatpush.msra.mxu0 0.0
    %52 = vmatpush.msra.mxu0 0.0
    %53 = vmatpush.msra.mxu0 0.0
    %54 = vmatpush.msra.mxu0 0.0
    %55 = vmatpush.msra.mxu0 0.0
    %56 = vmatpush.msra.mxu0 0.0
    %57 = vmatpush.msra.mxu0 0.0
    %58 = vmatpush.msra.mxu0 0.0
    %59 = vmatpush.msra.mxu0 0.0
    %60 = vmatpush.msra.mxu0 %v36
    %61 = vmatmul.f32.gmra.mxu0 %v40
    %v62 = vpop.f32.mrf.mxu0
    %v63 = vadd.f32 0.0, %v62
    %64 = vmatmul.f32.gmra.mxu0 %v43
    %v65 = vpop.f32.mrf.mxu0
    %v66 = vadd.f32 0.0, %v65
    %67 = vdwg.mxu0
    %68 = vmatpush.msra.mxu0 0.0
    %69 = vmatpush.msra.mxu0 0.0
    %70 = vmatpush.msra.mxu0 0.0
    %71 = vmatpush.msra.mxu0 0.0
    %72 = vmatpush.msra.mxu0 0.0
    %73 = vmatpush.msra.mxu0 0.0
    %74 = vmatpush.msra.mxu0 0.0
    %75 = vmatpush.msra.mxu0 0.0
    %76 = vmatpush.msra.mxu0 0.0
    %77 = vmatpush.msra.mxu0 0.0
    %78 = vmatpush.msra.mxu0 0.0
    %79 = vmatpush.msra.mxu0 0.0
    %80 = vmatpush.msra.mxu0 0.0
    %81 = vmatpush.msra.mxu0 0.0
    %82 = vmatpush.msra.mxu0 0.0
    %83 = vmatpush.msra.mxu0 %v37
    %84 = vmatmul.f32.gmra.mxu0 %v40
    %v85 = vpop.f32.mrf.mxu0
    %v86 = vadd.f32 0.0, %v85
    %87 = vmatmul.f32.gmra.mxu0 %v43
    %v88 = vpop.f32.mrf.mxu0
    %v89 = vadd.f32 0.0, %v88
    %90 = vdwg.mxu0
    %93 = vrot.lane.b32.xlu0 %v63, 32
    %v94 = vpop.permute.xlu0 %93
    %95 = vrot.lane.b32.xlu0 %v66, 32
    %v96 = vpop.permute.xlu0 %95
    %vm99 = vcmask 130048
    %v101 = vsel %vm99, %v34, 0
    %v104 = vsel %vm99, %v35, 0
    %106 = vmatpush.msra.mxu0 0.0
    %107 = vmatpush.msra.mxu0 0.0
    %108 = vmatpush.msra.mxu0 0.0
    %109 = vmatpush.msra.mxu0 0.0
    %110 = vmatpush.msra.mxu0 0.0
    %111 = vmatpush.msra.mxu0 0.0
    %112 = vmatpush.msra.mxu0 0.0
    %113 = vmatpush.msra.mxu0 0.0
    %114 = vmatpush.msra.mxu0 0.0
    %115 = vmatpush.msra.mxu0 0.0
    %116 = vmatpush.msra.mxu0 0.0
    %117 = vmatpush.msra.mxu0 0.0
    %118 = vmatpush.msra.mxu0 0.0
    %119 = vmatpush.msra.mxu0 0.0
    %120 = vmatpush.msra.mxu0 %v96
    %121 = vmatpush.msra.mxu0 %v94
    %122 = vmatmul.f32.gmra.mxu0 %v101
    %v123 = vpop.f32.mrf.mxu0
    %v124 = vadd.f32 0.0, %v123
    %125 = vmatmul.f32.gmra.mxu0 %v104
    %v126 = vpop.f32.mrf.mxu0
    %v127 = vadd.f32 0.0, %v126
    %128 = vdwg.mxu0
    %131 = vrot.lane.b32.xlu0 %v124, 64
    %v132 = vpop.permute.xlu0 %131
    %133 = vrot.lane.b32.xlu0 %v127, 64
    %v134 = vpop.permute.xlu0 %133
    %v137 = vadd.f32 %v63, %v132
    %v138 = vadd.f32 %v66, %v134
    %141 = vrot.lane.b32.xlu0 %v137, 64
    %v142 = vpop.permute.xlu0 %141
    %143 = vrot.lane.b32.xlu0 %v138, 64
    %v144 = vpop.permute.xlu0 %143
    %147 = vmatpush.msra.mxu0 0.0
    %148 = vmatpush.msra.mxu0 0.0
    %149 = vmatpush.msra.mxu0 0.0
    %150 = vmatpush.msra.mxu0 0.0
    %151 = vmatpush.msra.mxu0 0.0
    %152 = vmatpush.msra.mxu0 0.0
    %153 = vmatpush.msra.mxu0 0.0
    %154 = vmatpush.msra.mxu0 0.0
    %155 = vmatpush.msra.mxu0 0.0
    %156 = vmatpush.msra.mxu0 0.0
    %157 = vmatpush.msra.mxu0 0.0
    %158 = vmatpush.msra.mxu0 0.0
    %159 = vmatpush.msra.mxu0 0.0
    %160 = vmatpush.msra.mxu0 0.0
    %161 = vmatpush.msra.mxu0 %v144
    %162 = vmatpush.msra.mxu0 %v142
    %163 = vmatmul.f32.gmra.mxu0 %v101
    %v164 = vpop.f32.mrf.mxu0
    %v165 = vadd.f32 0.0, %v164
    %166 = vmatmul.f32.gmra.mxu0 %v104
    %v167 = vpop.f32.mrf.mxu0
    %v168 = vadd.f32 0.0, %v167
    %169 = vdwg.mxu0
    %172 = vrot.lane.b32.xlu0 %v165, 32
    %v173 = vpop.permute.xlu0 %172
    %174 = vrot.lane.b32.xlu0 %v168, 32
    %v175 = vpop.permute.xlu0 %174
    %v178 = vadd.f32 %v63, %v173
    %v179 = vadd.f32 %v66, %v175
    %182 = vrot.lane.b32.xlu0 %v178, 96
    %v183 = vpop.permute.xlu0 %182
    %184 = vrot.lane.b32.xlu0 %v179, 96
    %v185 = vpop.permute.xlu0 %184
    %188 = vmatpush.msra.mxu0 0.0
    %189 = vmatpush.msra.mxu0 0.0
    %190 = vmatpush.msra.mxu0 0.0
    %191 = vmatpush.msra.mxu0 0.0
    %192 = vmatpush.msra.mxu0 0.0
    %193 = vmatpush.msra.mxu0 0.0
    %194 = vmatpush.msra.mxu0 0.0
    %195 = vmatpush.msra.mxu0 0.0
    %196 = vmatpush.msra.mxu0 0.0
    %197 = vmatpush.msra.mxu0 0.0
    %198 = vmatpush.msra.mxu0 0.0
    %199 = vmatpush.msra.mxu0 0.0
    %200 = vmatpush.msra.mxu0 0.0
    %201 = vmatpush.msra.mxu0 0.0
    %202 = vmatpush.msra.mxu0 %v185
    %203 = vmatpush.msra.mxu0 %v183
    %204 = vmatmul.f32.gmra.mxu0 %v101
    %v205 = vpop.f32.mrf.mxu0
    %v206 = vadd.f32 0.0, %v205
    %207 = vmatmul.f32.gmra.mxu0 %v104
    %v208 = vpop.f32.mrf.mxu0
    %v209 = vadd.f32 0.0, %v208
    %210 = vdwg.mxu0
    %v211 = vadd.f32 %v63, %v206
    %v212 = vadd.f32 %v66, %v209
    %v213 = vld [vmem:[%s3] sm:$0x1]
    %v215 = vperm.slane %v213, 0
    %v217 = vadd.f32 %v211, %v215
    %v218 = vadd.f32 %v212, %v215
    %vm219 = vcmask 261120
    %220 = vst.msk [vmem:[#allocation5] sm:$0xff] %vm219, %v217
    %221 = vst.msk [vmem:[#allocation5 + $0x8] sm:$0xff] %vm219, %v218
    %224 = vrot.lane.b32.xlu0 %v86, 32
    %v225 = vpop.permute.xlu0 %224
    %226 = vrot.lane.b32.xlu0 %v89, 32
    %v227 = vpop.permute.xlu0 %226
    %vm230 = vcmask 523520
    %231 = vst.msk [vmem:[#allocation5] sm:$0xff] %vm230, %v225
    %232 = vst.msk [vmem:[#allocation5 + $0x8] sm:$0xff] %vm230, %v227
    // Predicated region
    $region22: #{tpu_custom_call.1} parent=1 // pred_check
      _
    $region23: #{tpu_custom_call.1} parent=1 // pred_check_branch
      %234 = sbr.rel (0) target = $region25
    $region24: #{tpu_custom_call.1} parent=1 // pred_region
      %236 = vsyncadd [#allocation4], 0
      %s237 = sshll.u32 [#allocation5], 4
      %s238 = int_to_ptr.vmem [resolvable:$true] %s237
      %s239 = sshll.u32 %s4, 4
      %s240 = int_to_ptr.hbm [resolvable:$true] %s239
      %245 = dma.vmem_to_hbm [thread:$0]  %s238, 256, %s240, [#allocation4], 128, 128, 8
    $region25: #{tpu_custom_call.1} parent=1 // pred_fallthru
      _
    // Predicated region
    $region26: #{tpu_custom_call.1} parent=1 // pred_check
      _
    $region27: #{tpu_custom_call.1} parent=1 // pred_check_branch
      %247 = sbr.rel (0) target = $region29
    $region28: #{tpu_custom_call.1} parent=1 // pred_region
      %249 = dma.done [#allocation4], 256
    $region29: #{tpu_custom_call.1} parent=1 // pred_fallthru
      _
    %250 = vsyncpa [#allocation3], 1
    %251 = vsyncpa [#allocation4], 1

</llo_original>
